<compile_context>
chip_gen: v7x
topology: tpu7x:2x2x1
jax: 0.10.0
libtpu: 0.0.40
codegen_flags: <defaults>
</compile_context>

<pallas_src>
import functools

import jax
import jax.numpy as jnp
from jax import lax
from jax.experimental import pallas as pl
from jax.experimental.pallas import tpu as pltpu


# ----------------------------- parameter setup ------------------------------
def edge2adj(edge, num_nodes):
    """Build a dense adjacency matrix from a (2, E) edge index (symmetric)."""
    # TODO(synk): ACME's exact edge2adj implementation is not available here;
    # we use the standard symmetric 0/1 adjacency built from the edge list.
    adj = jnp.zeros((num_nodes, num_nodes), jnp.float32)
    adj = adj.at[edge[0], edge[1]].set(1.0)
    adj = adj.at[edge[1], edge[0]].set(1.0)
    return adj


def make_bokeh_adj(edge, num_nodes):
    """Replicates BokehLayer.__init__: adj + I, then row-normalize."""
    adj = edge2adj(edge, num_nodes)
    adj = adj + jnp.eye(num_nodes, dtype=adj.dtype)
    adj = adj / jnp.sum(adj, axis=1, keepdims=True)
    return adj  # (N, N); the torch unsqueeze(0) broadcast is handled by the grid.


# ------------------------------ tiling helpers -------------------------------
def _round_up(x, m):
    return ((x + m - 1) // m) * m


def _sublane_multiple(itemsize):
    # f32 -> 8, bf16 -> 16, int8/fp8 -> 32 (sub-32-bit dtypes pack along sublanes).
    return max(8, 32 // max(1, int(itemsize)))


def _padded_block_bytes(lead, sublane_dim, lane_dim, itemsize):
    """Actual VMEM footprint of a (lead, sublane_dim, lane_dim) block."""
    return (int(lead)
            * _round_up(int(sublane_dim), _sublane_multiple(itemsize))
            * _round_up(int(lane_dim), 128)
            * int(itemsize))


def _chip_params():
    """Return (is_v7x, target_tile_bytes, vmem_ceiling_bytes) for this chip."""
    is_v7x = False
    vmem_phys = 128 << 20
    try:
        kind = str(getattr(jax.devices()[0], "device_kind", "")).lower()
        if "v7" in kind or "7x" in kind:
            is_v7x = True
    except Exception:
        pass
    try:
        cap = int(getattr(pltpu.get_tpu_info(), "vmem_capacity_bytes", 0) or 0)
        if cap:
            vmem_phys = cap
            if cap <= (64 << 20):   # v7x: 64 MiB physical VMEM per TensorCore
                is_v7x = True
    except Exception:
        pass
    if is_v7x:
        # 3.2 TB/s HBM: each ~0.35 us grid step "costs" ~1.1 MB of lost
        # transfer, so use bigger slabs but stay well under 64 MiB physical.
        target = 4 << 20
        ceiling = min(28 << 20, max(8 << 20, vmem_phys // 2 - (4 << 20)))
    else:
        # v5e / v6e: 128 MiB physical; ~2 MiB slabs measured at ~85% roofline.
        target = 2 << 20
        ceiling = min(48 << 20, vmem_phys // 2)
    return is_v7x, target, ceiling


def _choose_row_tile(N, itemsize, ceiling):
    """Tile the adjacency's row dim only when a full (N, N) resident block
    would eat too much of the VMEM budget (large N); otherwise keep it whole."""
    full = _padded_block_bytes(1, N, N, itemsize)
    if full <= ceiling // 3:
        return N
    sub = _sublane_multiple(itemsize)
    best = None
    for tn in range(sub, N, sub):
        if N % tn == 0 and _padded_block_bytes(1, tn, N, itemsize) <= (2 << 20):
            best = tn
    # TODO(synk): for truly huge N (a single adj row-block still too large) an
    # extra contraction grid axis with an f32 VMEM accumulator would be needed.
    return best if best is not None else N


def _choose_batch_and_feature_tiles(B, N, F, itemsize, budget):
    """Prefer contiguous full-F slabs and fold batch elements into one grid
    step (largest bblk whose slab fits the byte budget); only tile F when a
    single (1, N, F) slab already exceeds the budget."""
    per_b_full = _padded_block_bytes(1, N, F, itemsize)
    if per_b_full <= budget:
        bblk = 1
        for d in range(1, B + 1):
            if B % d == 0 and d * per_b_full <= budget:
                bblk = d
        return bblk, F
    # One batch element is already too big: tile the (lane) feature dim.
    if F % 128 == 0:
        cands = [d for d in range(128, F + 1, 128) if F % d == 0]
    else:
        cands = [F]   # a full-extent block is always layout-legal
    fits = [c for c in cands if _padded_block_bytes(1, N, c, itemsize) <= budget]
    tf = max(fits) if fits else min(cands)
    return 1, tf


# --------------------------------- kernel -----------------------------------
def _bokeh_kernel(adj_ref, x_ref, o_ref):
    # adj_ref: (tn, N) row-normalized adjacency block (resident when tn == N)
    # x_ref:   (N, tf) or (bblk, N, tf) input tile
    # o_ref:   (tn, tf) or (bblk, tn, tf) output tile
    adj = adj_ref[...]
    if x_ref.ndim == 2:               # unit batch dim squeezed away (bblk == 1)
        o_ref[...] = jnp.dot(
            adj, x_ref[...], preferred_element_type=jnp.float32
        ).astype(o_ref.dtype)
    else:
        bblk = x_ref.shape[0]

        def one(i):
            return jnp.dot(
                adj, x_ref[i], preferred_element_type=jnp.float32
            ).astype(o_ref.dtype)

        if bblk <= 8:
            # Unrolled: bblk plain (tn,N)@(N,tf) MXU matmuls sharing one adj tile.
            for i in range(bblk):
                o_ref[i] = one(i)
        else:
            def body(i, carry):
                o_ref[i] = one(i)
                return carry

            lax.fori_loop(0, bblk, body, 0)


@functools.partial(
    jax.jit,
    static_argnames=("bblk", "tn", "tf", "vmem_limit", "single_buffer_adj"),
)
def _bokeh_pallas(adj, x_flat, *, bblk, tn, tf, vmem_limit, single_buffer_adj):
    B, N, F = x_flat.shape
    itemsize = x_flat.dtype.itemsize
    # Row axis innermost: the x slab (index independent of r) stays resident.
    grid = (B // bblk, F // tf, N // tn)

    if single_buffer_adj:
        # Constant index_map -> the adjacency is DMA'd exactly once; a second
        # buffer would be pure VMEM waste.
        adj_spec = pl.BlockSpec((tn, N), lambda b, f, r: (r, 0),
                                pipeline_mode=pl.Buffered(1))
    else:
        adj_spec = pl.BlockSpec((tn, N), lambda b, f, r: (r, 0))

    if bblk == 1:
        # Squeeze the unit batch dim -> clean lane-dense 2-D refs in the kernel.
        x_spec = pl.BlockSpec((None, N, tf), lambda b, f, r: (b, 0, f))
        o_spec = pl.BlockSpec((None, tn, tf), lambda b, f, r: (b, r, f))
    else:
        x_spec = pl.BlockSpec((bblk, N, tf), lambda b, f, r: (b, 0, f))
        o_spec = pl.BlockSpec((bblk, tn, tf), lambda b, f, r: (b, r, f))

    cost = pl.CostEstimate(
        flops=2 * B * N * N * F,
        transcendentals=0,
        bytes_accessed=2 * B * N * F * itemsize + N * N * adj.dtype.itemsize,
    )

    return pl.pallas_call(
        _bokeh_kernel,
        out_shape=jax.ShapeDtypeStruct((B, N, F), x_flat.dtype),
        grid_spec=pltpu.PrefetchScalarGridSpec(
            num_scalar_prefetch=0,
            grid=grid,
            in_specs=[adj_spec, x_spec],
            out_specs=o_spec,
        ),
        compiler_params=pltpu.CompilerParams(
            dimension_semantics=("parallel", "parallel", "arbitrary"),
            vmem_limit_bytes=vmem_limit,
        ),
        cost_estimate=cost,
    )(adj, x_flat)


def bokeh_forward(adj, x):
    """adj: (N, N) row-normalized adjacency, x: (B, N, ...) -> (B, N, ...)."""
    orig_shape = x.shape
    B, N = int(orig_shape[0]), int(orig_shape[1])
    F = 1
    for d in orig_shape[2:]:
        F *= int(d)
    x_flat = x.reshape(B, N, F)

    # Match operand dtypes so the MXU isn't fed a mixed f32 x bf16 dot (which
    # would upcast the whole x tile in-kernel); accumulation stays f32.
    if jnp.issubdtype(x_flat.dtype, jnp.floating) and adj.dtype != x_flat.dtype:
        adj = adj.astype(x_flat.dtype)

    itemsize = x_flat.dtype.itemsize
    is_v7x, target_tile, ceiling = _chip_params()

    tn = _choose_row_tile(N, adj.dtype.itemsize, ceiling)
    adj_block_bytes = _padded_block_bytes(1, tn, N, adj.dtype.itemsize)
    single_buffer_adj = (tn == N) and adj_block_bytes >= (512 << 10)
    adj_buf_bytes = adj_block_bytes * (1 if single_buffer_adj else 2)

    # Per x/o tile budget: generation target, bounded by what the VMEM ceiling
    # leaves after the adjacency buffers (2 input + 2 output buffers).
    budget = max(128 << 10, min(target_tile, (ceiling - adj_buf_bytes) // 4))
    bblk, tf = _choose_batch_and_feature_tiles(B, N, F, itemsize, budget)

    # v7x has two TensorCores: give the grid >= 2 steps when we cheaply can.
    if is_v7x and (B // bblk) * (F // tf) * (N // tn) < 2 and bblk % 2 == 0:
        bblk //= 2

    x_tile = _padded_block_bytes(bblk, N, tf, itemsize)
    o_tile = _padded_block_bytes(bblk, tn, tf, itemsize)
    vmem_needed = 2 * x_tile + 2 * o_tile + adj_buf_bytes + (1 << 20)
    vmem_limit = int(max(vmem_needed, 8 << 20))   # never clamp below the need

    out_flat = _bokeh_pallas(
        adj, x_flat, bblk=int(bblk), tn=int(tn), tf=int(tf),
        vmem_limit=vmem_limit, single_buffer_adj=bool(single_buffer_adj),
    )
    return out_flat.reshape(orig_shape)


# ---------------------------------- main -------------------------------------
if __name__ == "__main__":
    key = jax.random.PRNGKey(0)

    B, N, C, H, W = 2, 8, 4, 16, 16  # x: (B, N, C, H, W); F = C*H*W = 1024

    # Ring topology over the N view points: (2, N) edge tensor.
    src = jnp.arange(N, dtype=jnp.int32)
    dst = (src + 1) % N
    edge = jnp.stack([src, dst], axis=0)

    adj = make_bokeh_adj(edge, N)  # (N, N) row-normalized adjacency

    x = jax.random.normal(key, (B, N, C, H, W), dtype=jnp.float32)

    out = bokeh_forward(adj, x)
    out = jax.block_until_ready(out)

    # Reference check in plain JAX (matches the torch matmul/view semantics).
    ref = jnp.matmul(adj[None], x.reshape(B, N, -1)).reshape(x.shape)
    assert out.shape == x.shape
    assert jnp.allclose(out, ref, atol=1e-5, rtol=1e-5)

    print("KERNEL_OK")
</pallas_src>

<mosaic_0001>
module attributes {stable_mosaic.version = 11 : i64} {
  func.func @_bokeh_kernel(%arg0: i32, %arg1: i32, %arg2: i32, %arg3: memref<8x8xf32, #tpu.memory_space<vmem>>, %arg4: memref<2x8x1024xf32, #tpu.memory_space<vmem>>, %arg5: memref<2x8x1024xf32, #tpu.memory_space<vmem>>) attributes {dimension_semantics = [#tpu.dimension_semantics<parallel>, #tpu.dimension_semantics<parallel>, #tpu.dimension_semantics<arbitrary>], iteration_bounds = array<i64: 1, 1, 1>, scalar_prefetch = 0 : i64, scratch_operands = 0 : i64, tpu.core_type = #tpu.core_type<tc>, window_params = [{transform_indices = @transform_0, window_bounds = array<i64: 8, 8>}, {transform_indices = @transform_1, window_bounds = array<i64: 2, 8, 1024>}, {transform_indices = @transform_2, window_bounds = array<i64: 2, 8, 1024>}]} {
    %c0 = arith.constant 0 : index
    %c0_0 = arith.constant 0 : index
    %0 = vector.load %arg3[%c0, %c0_0] : memref<8x8xf32, #tpu.memory_space<vmem>>, vector<8x8xf32>
    %c0_1 = arith.constant 0 : index
    %c0_2 = arith.constant 0 : index
    %c0_3 = arith.constant 0 : index
    %1 = vector.load %arg4[%c0_1, %c0_2, %c0_3] : memref<2x8x1024xf32, #tpu.memory_space<vmem>>, vector<1x8x1024xf32>
    %2 = vector.shape_cast %1 : vector<1x8x1024xf32> to vector<8x1024xf32>
    %cst = arith.constant dense<0.000000e+00> : vector<8x1024xf32>
    %3 = tpu.matmul %0, %2, %cst {dimension_numbers = #tpu.dot_dimension_numbers<[1], [0], [0], [1], [0, 0, 1, 1], [], []>} : vector<8x8xf32>, vector<8x1024xf32>, vector<8x1024xf32> -> vector<8x1024xf32>
    %c0_4 = arith.constant 0 : index
    %c0_5 = arith.constant 0 : index
    %c0_6 = arith.constant 0 : index
    %4 = vector.load %arg5[%c0_4, %c0_5, %c0_6] : memref<2x8x1024xf32, #tpu.memory_space<vmem>>, vector<1x8x1024xf32>
    %5 = vector.shape_cast %4 : vector<1x8x1024xf32> to vector<8x1024xf32>
    %6 = vector.shape_cast %3 : vector<8x1024xf32> to vector<1x8x1024xf32>
    tpu.vector_store %arg5[%c0_4, %c0_5, %c0_6], %6 {strides = array<i32>} : memref<2x8x1024xf32, #tpu.memory_space<vmem>>, vector<1x8x1024xf32>,
    %c1 = arith.constant 1 : index
    %c0_7 = arith.constant 0 : index
    %c0_8 = arith.constant 0 : index
    %7 = vector.load %arg4[%c1, %c0_7, %c0_8] : memref<2x8x1024xf32, #tpu.memory_space<vmem>>, vector<1x8x1024xf32>
    %8 = vector.shape_cast %7 : vector<1x8x1024xf32> to vector<8x1024xf32>
    %cst_9 = arith.constant dense<0.000000e+00> : vector<8x1024xf32>
    %9 = tpu.matmul %0, %8, %cst_9 {dimension_numbers = #tpu.dot_dimension_numbers<[1], [0], [0], [1], [0, 0, 1, 1], [], []>} : vector<8x8xf32>, vector<8x1024xf32>, vector<8x1024xf32> -> vector<8x1024xf32>
    %c1_10 = arith.constant 1 : index
    %c0_11 = arith.constant 0 : index
    %c0_12 = arith.constant 0 : index
    %10 = vector.load %arg5[%c1_10, %c0_11, %c0_12] : memref<2x8x1024xf32, #tpu.memory_space<vmem>>, vector<1x8x1024xf32>
    %11 = vector.shape_cast %10 : vector<1x8x1024xf32> to vector<8x1024xf32>
    %12 = vector.shape_cast %9 : vector<8x1024xf32> to vector<1x8x1024xf32>
    tpu.vector_store %arg5[%c1_10, %c0_11, %c0_12], %12 {strides = array<i32>} : memref<2x8x1024xf32, #tpu.memory_space<vmem>>, vector<1x8x1024xf32>,
    return
  }
  func.func @transform_0(%arg0: i32, %arg1: i32, %arg2: i32) -> (i32, i32) {
    %c0_i32 = arith.constant 0 : i32
    %c0_i32_0 = arith.constant 0 : i32
    return %arg2, %c0_i32 : i32, i32
  }
  func.func @transform_1(%arg0: i32, %arg1: i32, %arg2: i32) -> (i32, i32, i32) {
    %c0_i32 = arith.constant 0 : i32
    %c0_i32_0 = arith.constant 0 : i32
    return %arg0, %c0_i32, %arg1 : i32, i32, i32
  }
  func.func @transform_2(%arg0: i32, %arg1: i32, %arg2: i32) -> (i32, i32, i32) {
    %c0_i32 = arith.constant 0 : i32
    return %arg0, %arg2, %arg1 : i32, i32, i32
  }
}

</mosaic_0001>

<llo_original>
// kernel: _bokeh_pallas.1
$region0: #{_bokeh_pallas.1}
  #allocation0 [shape = 'u32[]', space=smem, size = 0x4, offset = 0x4, fixed_abs, tag = 'smem constant byte address 0x4 - core index']
  #allocation1 [shape = 'u32[144,128]{1,0:T(1,128)}', space=vmem, size = 0x12000, scoped, tag = 'internal scratch']
  %s0 = inlined_call_operand.hbm [shape: f32[8,8], index: 0, kind: input, shape index: {}]
  %s1 = inlined_call_operand.hbm [shape: f32[2,8,1024], index: 1, kind: input, shape index: {}]
  %s2 = inlined_call_operand.hbm [shape: f32[2,8,1024], index: 2, kind: output, shape index: {}]
  %s3 = sld [smem:[#allocation0]]
  $region26: #{_bokeh_pallas.1} parent=0
    _
  %s5 = ssub.s32 1, %s3
  %s6 = scalar_select 0, %s5, %s3
  $region1: #{_bokeh_pallas.1} parent=0
    #allocation2 [shape = 'u8[4096]{0}', space=vmem, size = 0x1000, scoped, tag = 'input window, operand 0, single buffered']
    #allocation3 [shape = 's32[1]{0}', space=sflag, size = 0x4, scoped, tag = 'scoped memory for _bokeh_pallas.1']
    #allocation4 [shape = 's32[1]{0}', space=sflag, size = 0x4, scoped, tag = 'scoped memory for _bokeh_pallas.1']
    #allocation5 [shape = 'u8[65536]{0}', space=vmem, size = 0x10000, scoped, tag = 'input window, operand 1, single buffered']
    #allocation6 [shape = 's32[1]{0}', space=sflag, size = 0x4, scoped, tag = 'scoped memory for _bokeh_pallas.1']
    #allocation7 [shape = 'u8[65536]{0}', space=vmem, size = 0x10000, scoped, tag = 'output window, operand 0, single buffered']
    %7 = vsyncpa [#allocation3], 0
    %8 = vsyncpa [#allocation6], 0
    %9 = vsyncpa [#allocation4], 0
    // Predicated region
    $region2: #{_bokeh_pallas.1} parent=1 // pred_check
      _
    $region3: #{_bokeh_pallas.1} parent=1 // pred_check_branch
      %11 = sbr.rel (0) target = $region5
    $region4: #{_bokeh_pallas.1} parent=1 // pred_region
      %s13 = ssub.s32 128, 128
      %14 = vsyncadd [#allocation3], %s13
      %s16 = sshll.u32 [#allocation2], 4
      %s17 = int_to_ptr.vmem [resolvable:$true] %s16
      %19 = dma.hbm_to_vmem [thread:$0]  %s0, 128, %s17, [#allocation3]
    $region5: #{_bokeh_pallas.1} parent=1 // pred_fallthru
      _
    // Predicated region
    $region6: #{_bokeh_pallas.1} parent=1 // pred_check
      _
    $region7: #{_bokeh_pallas.1} parent=1 // pred_check_branch
      %21 = sbr.rel (0) target = $region9
    $region8: #{_bokeh_pallas.1} parent=1 // pred_region
      %s23 = ssub.s32 2048, 2048
      %24 = vsyncadd [#allocation6], %s23
      %s25 = sshll.u32 [#allocation5], 4
      %s26 = int_to_ptr.vmem [resolvable:$true] %s25
      %31 = dma.hbm_to_vmem [thread:$0]  %s1, 2048, %s26, [#allocation6], 1024, 1024, 64
    $region9: #{_bokeh_pallas.1} parent=1 // pred_fallthru
      _
    // Predicated region
    $region10: #{_bokeh_pallas.1} parent=1 // pred_check
      _
    $region11: #{_bokeh_pallas.1} parent=1 // pred_check_branch
      %33 = sbr.rel (0) target = $region13
    $region12: #{_bokeh_pallas.1} parent=1 // pred_region
      %34 = dma.done [#allocation3], 128
    $region13: #{_bokeh_pallas.1} parent=1 // pred_fallthru
      _
    // Predicated region
    $region14: #{_bokeh_pallas.1} parent=1 // pred_check
      _
    $region15: #{_bokeh_pallas.1} parent=1 // pred_check_branch
      %36 = sbr.rel (0) target = $region17
    $region16: #{_bokeh_pallas.1} parent=1 // pred_region
      %37 = dma.done [#allocation6], 2048
    $region17: #{_bokeh_pallas.1} parent=1 // pred_fallthru
      _
    %v38 = vld [vmem:[#allocation2] sm:$0xff]
    %v39 = vld [vmem:[#allocation5] sm:$0xff]
    %v40 = vld [vmem:[#allocation5 + $0x8] sm:$0xff]
    %v41 = vld [vmem:[#allocation5 + $0x10] sm:$0xff]
    %v42 = vld [vmem:[#allocation5 + $0x18] sm:$0xff]
    %v43 = vld [vmem:[#allocation5 + $0x20] sm:$0xff]
    %v44 = vld [vmem:[#allocation5 + $0x28] sm:$0xff]
    %v45 = vld [vmem:[#allocation5 + $0x30] sm:$0xff]
    %v46 = vld [vmem:[#allocation5 + $0x38] sm:$0xff]
    %vm47 = vcmask 64512
    %v49 = vsel %vm47, %v38, 0
    %51 = vmatprep.subr.mxu0 %v40
    %52 = vmatpush1.msra.mxu0 %v39
    %53 = vmatprep.subr.mxu0 0.0
    %54 = vmatpush1.msra.mxu0 0.0
    %55 = vmatprep.subr.mxu0 0.0
    %56 = vmatpush1.msra.mxu0 0.0
    %57 = vmatprep.subr.mxu0 0.0
    %58 = vmatpush1.msra.mxu0 0.0
    %59 = vmatprep.subr.mxu0 0.0
    %60 = vmatpush1.msra.mxu0 0.0
    %61 = vmatprep.subr.mxu0 0.0
    %62 = vmatpush1.msra.mxu0 0.0
    %63 = vmatprep.subr.mxu0 0.0
    %64 = vmatpush1.msra.mxu0 0.0
    %65 = vmatprep.subr.mxu0 0.0
    %66 = vmatpush1.msra.mxu0 0.0
    %67 = vmatprep.subr.mxu0 0.0
    %68 = vmatpush1.msra.mxu0 0.0
    %69 = vmatprep.subr.mxu0 0.0
    %70 = vmatpush1.msra.mxu0 0.0
    %71 = vmatprep.subr.mxu0 0.0
    %72 = vmatpush1.msra.mxu0 0.0
    %73 = vmatprep.subr.mxu0 0.0
    %74 = vmatpush1.msra.mxu0 0.0
    %75 = vmatprep.subr.mxu0 0.0
    %76 = vmatpush1.msra.mxu0 0.0
    %77 = vmatprep.subr.mxu0 0.0
    %78 = vmatpush1.msra.mxu0 0.0
    %79 = vmatprep.subr.mxu0 0.0
    %80 = vmatpush1.msra.mxu0 0.0
    %81 = vmatprep.subr.mxu0 0.0
    %82 = vmatpush1.msra.mxu0 0.0
    %83 = vmatprep.subr.mxu0 0.0
    %84 = vmatpush1.msra.mxu0 0.0
    %85 = vmatprep.subr.mxu0 0.0
    %86 = vmatpush1.msra.mxu0 0.0
    %87 = vmatprep.subr.mxu0 0.0
    %88 = vmatpush1.msra.mxu0 0.0
    %89 = vmatprep.subr.mxu0 0.0
    %90 = vmatpush1.msra.mxu0 0.0
    %91 = vmatprep.subr.mxu0 0.0
    %92 = vmatpush1.msra.mxu0 0.0
    %93 = vmatprep.subr.mxu0 0.0
    %94 = vmatpush1.msra.mxu0 0.0
    %95 = vmatprep.subr.mxu0 0.0
    %96 = vmatpush1.msra.mxu0 0.0
    %97 = vmatprep.subr.mxu0 0.0
    %98 = vmatpush1.msra.mxu0 0.0
    %99 = vmatprep.subr.mxu0 0.0
    %100 = vmatpush1.msra.mxu0 0.0
    %101 = vmatprep.subr.mxu0 0.0
    %102 = vmatpush1.msra.mxu0 0.0
    %103 = vmatprep.subr.mxu0 0.0
    %104 = vmatpush1.msra.mxu0 0.0
    %105 = vmatprep.subr.mxu0 0.0
    %106 = vmatpush1.msra.mxu0 0.0
    %107 = vmatprep.subr.mxu0 0.0
    %108 = vmatpush1.msra.mxu0 0.0
    %109 = vmatprep.subr.mxu0 0.0
    %110 = vmatpush1.msra.mxu0 0.0
    %111 = vmatprep.subr.mxu0 0.0
    %112 = vmatpush1.msra.mxu0 0.0
    %113 = vmatprep.subr.mxu0 0.0
    %114 = vmatpush1.msra.mxu0 0.0
    %115 = vmatprep.mubr.f32.mxu0 0.0
    %116 = vmatmul.mubr.f32.gmra.mrb[0].mxu0 %v49
    %v117 = vpop.f32.mrb[0].mxu0
    %v118 = vadd.f32 0.0, %v117
    %v119 = vpop.f32.mrb[0].mxu0
    %v120 = vadd.f32 0.0, %v119
    %121 = vdwg.mxu0
    %122 = vmatprep.subr.mxu0 %v42
    %123 = vmatpush1.msra.mxu0 %v41
    %124 = vmatprep.subr.mxu0 0.0
    %125 = vmatpush1.msra.mxu0 0.0
    %126 = vmatprep.subr.mxu0 0.0
    %127 = vmatpush1.msra.mxu0 0.0
    %128 = vmatprep.subr.mxu0 0.0
    %129 = vmatpush1.msra.mxu0 0.0
    %130 = vmatprep.subr.mxu0 0.0
    %131 = vmatpush1.msra.mxu0 0.0
    %132 = vmatprep.subr.mxu0 0.0
    %133 = vmatpush1.msra.mxu0 0.0
    %134 = vmatprep.subr.mxu0 0.0
    %135 = vmatpush1.msra.mxu0 0.0
    %136 = vmatprep.subr.mxu0 0.0
    %137 = vmatpush1.msra.mxu0 0.0
    %138 = vmatprep.subr.mxu0 0.0
    %139 = vmatpush1.msra.mxu0 0.0
    %140 = vmatprep.subr.mxu0 0.0
    %141 = vmatpush1.msra.mxu0 0.0
    %142 = vmatprep.subr.mxu0 0.0
    %143 = vmatpush1.msra.mxu0 0.0
    %144 = vmatprep.subr.mxu0 0.0
    %145 = vmatpush1.msra.mxu0 0.0
    %146 = vmatprep.subr.mxu0 0.0
    %147 = vmatpush1.msra.mxu0 0.0
    %148 = vmatprep.subr.mxu0 0.0
    %149 = vmatpush1.msra.mxu0 0.0
    %150 = vmatprep.subr.mxu0 0.0
    %151 = vmatpush1.msra.mxu0 0.0
    %152 = vmatprep.subr.mxu0 0.0
    %153 = vmatpush1.msra.mxu0 0.0
    %154 = vmatprep.subr.mxu0 0.0
    %155 = vmatpush1.msra.mxu0 0.0
    %156 = vmatprep.subr.mxu0 0.0
    %157 = vmatpush1.msra.mxu0 0.0
    %158 = vmatprep.subr.mxu0 0.0
    %159 = vmatpush1.msra.mxu0 0.0
    %160 = vmatprep.subr.mxu0 0.0
    %161 = vmatpush1.msra.mxu0 0.0
    %162 = vmatprep.subr.mxu0 0.0
    %163 = vmatpush1.msra.mxu0 0.0
    %164 = vmatprep.subr.mxu0 0.0
    %165 = vmatpush1.msra.mxu0 0.0
    %166 = vmatprep.subr.mxu0 0.0
    %167 = vmatpush1.msra.mxu0 0.0
    %168 = vmatprep.subr.mxu0 0.0
    %169 = vmatpush1.msra.mxu0 0.0
    %170 = vmatprep.subr.mxu0 0.0
    %171 = vmatpush1.msra.mxu0 0.0
    %172 = vmatprep.subr.mxu0 0.0
    %173 = vmatpush1.msra.mxu0 0.0
    %174 = vmatprep.subr.mxu0 0.0
    %175 = vmatpush1.msra.mxu0 0.0
    %176 = vmatprep.subr.mxu0 0.0
    %177 = vmatpush1.msra.mxu0 0.0
    %178 = vmatprep.subr.mxu0 0.0
    %179 = vmatpush1.msra.mxu0 0.0
    %180 = vmatprep.subr.mxu0 0.0
    %181 = vmatpush1.msra.mxu0 0.0
    %182 = vmatprep.subr.mxu0 0.0
    %183 = vmatpush1.msra.mxu0 0.0
    %184 = vmatprep.subr.mxu0 0.0
    %185 = vmatpush1.msra.mxu0 0.0
    %186 = vmatprep.mubr.f32.mxu0 0.0
    %187 = vmatmul.mubr.f32.gmra.mrb[0].mxu0 %v49
    %v188 = vpop.f32.mrb[0].mxu0
    %v189 = vadd.f32 0.0, %v188
    %v190 = vpop.f32.mrb[0].mxu0
    %v191 = vadd.f32 0.0, %v190
    %192 = vdwg.mxu0
    %193 = vmatprep.subr.mxu0 %v44
    %194 = vmatpush1.msra.mxu0 %v43
    %195 = vmatprep.subr.mxu0 0.0
    %196 = vmatpush1.msra.mxu0 0.0
    %197 = vmatprep.subr.mxu0 0.0
    %198 = vmatpush1.msra.mxu0 0.0
    %199 = vmatprep.subr.mxu0 0.0
    %200 = vmatpush1.msra.mxu0 0.0
    %201 = vmatprep.subr.mxu0 0.0
    %202 = vmatpush1.msra.mxu0 0.0
    %203 = vmatprep.subr.mxu0 0.0
    %204 = vmatpush1.msra.mxu0 0.0
    %205 = vmatprep.subr.mxu0 0.0
    %206 = vmatpush1.msra.mxu0 0.0
    %207 = vmatprep.subr.mxu0 0.0
    %208 = vmatpush1.msra.mxu0 0.0
    %209 = vmatprep.subr.mxu0 0.0
    %210 = vmatpush1.msra.mxu0 0.0
    %211 = vmatprep.subr.mxu0 0.0
    %212 = vmatpush1.msra.mxu0 0.0
    %213 = vmatprep.subr.mxu0 0.0
    %214 = vmatpush1.msra.mxu0 0.0
    %215 = vmatprep.subr.mxu0 0.0
    %216 = vmatpush1.msra.mxu0 0.0
    %217 = vmatprep.subr.mxu0 0.0
    %218 = vmatpush1.msra.mxu0 0.0
    %219 = vmatprep.subr.mxu0 0.0
    %220 = vmatpush1.msra.mxu0 0.0
    %221 = vmatprep.subr.mxu0 0.0
    %222 = vmatpush1.msra.mxu0 0.0
    %223 = vmatprep.subr.mxu0 0.0
    %224 = vmatpush1.msra.mxu0 0.0
    %225 = vmatprep.subr.mxu0 0.0
    %226 = vmatpush1.msra.mxu0 0.0
    %227 = vmatprep.subr.mxu0 0.0
    %228 = vmatpush1.msra.mxu0 0.0
    %229 = vmatprep.subr.mxu0 0.0
    %230 = vmatpush1.msra.mxu0 0.0
    %231 = vmatprep.subr.mxu0 0.0
    %232 = vmatpush1.msra.mxu0 0.0
    %233 = vmatprep.subr.mxu0 0.0
    %234 = vmatpush1.msra.mxu0 0.0
    %235 = vmatprep.subr.mxu0 0.0
    %236 = vmatpush1.msra.mxu0 0.0
    %237 = vmatprep.subr.mxu0 0.0
    %238 = vmatpush1.msra.mxu0 0.0
    %239 = vmatprep.subr.mxu0 0.0
    %240 = vmatpush1.msra.mxu0 0.0
    %241 = vmatprep.subr.mxu0 0.0
    %242 = vmatpush1.msra.mxu0 0.0
    %243 = vmatprep.subr.mxu0 0.0
    %244 = vmatpush1.msra.mxu0 0.0
    %245 = vmatprep.subr.mxu0 0.0
    %246 = vmatpush1.msra.mxu0 0.0
    %247 = vmatprep.subr.mxu0 0.0
    %248 = vmatpush1.msra.mxu0 0.0
    %249 = vmatprep.subr.mxu0 0.0
    %250 = vmatpush1.msra.mxu0 0.0
    %251 = vmatprep.subr.mxu0 0.0
    %252 = vmatpush1.msra.mxu0 0.0
    %253 = vmatprep.subr.mxu0 0.0
    %254 = vmatpush1.msra.mxu0 0.0
    %255 = vmatprep.subr.mxu0 0.0
    %256 = vmatpush1.msra.mxu0 0.0
    %257 = vmatprep.mubr.f32.mxu0 0.0
    %258 = vmatmul.mubr.f32.gmra.mrb[0].mxu0 %v49
    %v259 = vpop.f32.mrb[0].mxu0
    %v260 = vadd.f32 0.0, %v259
    %v261 = vpop.f32.mrb[0].mxu0
    %v262 = vadd.f32 0.0, %v261
    %263 = vdwg.mxu0
    %264 = vmatprep.subr.mxu0 %v46
    %265 = vmatpush1.msra.mxu0 %v45
    %266 = vmatprep.subr.mxu0 0.0
    %267 = vmatpush1.msra.mxu0 0.0
    %268 = vmatprep.subr.mxu0 0.0
    %269 = vmatpush1.msra.mxu0 0.0
    %270 = vmatprep.subr.mxu0 0.0
    %271 = vmatpush1.msra.mxu0 0.0
    %272 = vmatprep.subr.mxu0 0.0
    %273 = vmatpush1.msra.mxu0 0.0
    %274 = vmatprep.subr.mxu0 0.0
    %275 = vmatpush1.msra.mxu0 0.0
    %276 = vmatprep.subr.mxu0 0.0
    %277 = vmatpush1.msra.mxu0 0.0
    %278 = vmatprep.subr.mxu0 0.0
    %279 = vmatpush1.msra.mxu0 0.0
    %280 = vmatprep.subr.mxu0 0.0
    %281 = vmatpush1.msra.mxu0 0.0
    %282 = vmatprep.subr.mxu0 0.0
    %283 = vmatpush1.msra.mxu0 0.0
    %284 = vmatprep.subr.mxu0 0.0
    %285 = vmatpush1.msra.mxu0 0.0
    %286 = vmatprep.subr.mxu0 0.0
    %287 = vmatpush1.msra.mxu0 0.0
    %288 = vmatprep.subr.mxu0 0.0
    %289 = vmatpush1.msra.mxu0 0.0
    %290 = vmatprep.subr.mxu0 0.0
    %291 = vmatpush1.msra.mxu0 0.0
    %292 = vmatprep.subr.mxu0 0.0
    %293 = vmatpush1.msra.mxu0 0.0
    %294 = vmatprep.subr.mxu0 0.0
    %295 = vmatpush1.msra.mxu0 0.0
    %296 = vmatprep.subr.mxu0 0.0
    %297 = vmatpush1.msra.mxu0 0.0
    %298 = vmatprep.subr.mxu0 0.0
    %299 = vmatpush1.msra.mxu0 0.0
    %300 = vmatprep.subr.mxu0 0.0
    %301 = vmatpush1.msra.mxu0 0.0
    %302 = vmatprep.subr.mxu0 0.0
    %303 = vmatpush1.msra.mxu0 0.0
    %304 = vmatprep.subr.mxu0 0.0
    %305 = vmatpush1.msra.mxu0 0.0
    %306 = vmatprep.subr.mxu0 0.0
    %307 = vmatpush1.msra.mxu0 0.0
    %308 = vmatprep.subr.mxu0 0.0
    %309 = vmatpush1.msra.mxu0 0.0
    %310 = vmatprep.subr.mxu0 0.0
    %311 = vmatpush1.msra.mxu0 0.0
    %312 = vmatprep.subr.mxu0 0.0
    %313 = vmatpush1.msra.mxu0 0.0
    %314 = vmatprep.subr.mxu0 0.0
    %315 = vmatpush1.msra.mxu0 0.0
    %316 = vmatprep.subr.mxu0 0.0
    %317 = vmatpush1.msra.mxu0 0.0
    %318 = vmatprep.subr.mxu0 0.0
    %319 = vmatpush1.msra.mxu0 0.0
    %320 = vmatprep.subr.mxu0 0.0
    %321 = vmatpush1.msra.mxu0 0.0
    %322 = vmatprep.subr.mxu0 0.0
    %323 = vmatpush1.msra.mxu0 0.0
    %324 = vmatprep.subr.mxu0 0.0
    %325 = vmatpush1.msra.mxu0 0.0
    %326 = vmatprep.subr.mxu0 0.0
    %327 = vmatpush1.msra.mxu0 0.0
    %328 = vmatprep.mubr.f32.mxu0 0.0
    %329 = vmatmul.mubr.f32.gmra.mrb[0].mxu0 %v49
    %v330 = vpop.f32.mrb[0].mxu0
    %v331 = vadd.f32 0.0, %v330
    %v332 = vpop.f32.mrb[0].mxu0
    %v333 = vadd.f32 0.0, %v332
    %334 = vdwg.mxu0
    %335 = vst [vmem:[#allocation7] sm:$0xff] %v118
    %336 = vst [vmem:[#allocation7 + $0x8] sm:$0xff] %v120
    %337 = vst [vmem:[#allocation7 + $0x10] sm:$0xff] %v189
    %338 = vst [vmem:[#allocation7 + $0x18] sm:$0xff] %v191
    %339 = vst [vmem:[#allocation7 + $0x20] sm:$0xff] %v260
    %340 = vst [vmem:[#allocation7 + $0x28] sm:$0xff] %v262
    %341 = vst [vmem:[#allocation7 + $0x30] sm:$0xff] %v331
    %342 = vst [vmem:[#allocation7 + $0x38] sm:$0xff] %v333
    %s343 = scalar_lea.vmem [#allocation5], 64
    %v344 = vld [vmem:[%s343] sm:$0xff]
    %v345 = vld [vmem:[%s343 + $0x8] sm:$0xff]
    %v346 = vld [vmem:[%s343 + $0x10] sm:$0xff]
    %v347 = vld [vmem:[%s343 + $0x18] sm:$0xff]
    %v348 = vld [vmem:[%s343 + $0x20] sm:$0xff]
    %v349 = vld [vmem:[%s343 + $0x28] sm:$0xff]
    %v350 = vld [vmem:[%s343 + $0x30] sm:$0xff]
    %v351 = vld [vmem:[%s343 + $0x38] sm:$0xff]
    %352 = vmatprep.subr.mxu0 %v345
    %353 = vmatpush1.msra.mxu0 %v344
    %354 = vmatprep.subr.mxu0 0.0
    %355 = vmatpush1.msra.mxu0 0.0
    %356 = vmatprep.subr.mxu0 0.0
    %357 = vmatpush1.msra.mxu0 0.0
    %358 = vmatprep.subr.mxu0 0.0
    %359 = vmatpush1.msra.mxu0 0.0
    %360 = vmatprep.subr.mxu0 0.0
    %361 = vmatpush1.msra.mxu0 0.0
    %362 = vmatprep.subr.mxu0 0.0
    %363 = vmatpush1.msra.mxu0 0.0
    %364 = vmatprep.subr.mxu0 0.0
    %365 = vmatpush1.msra.mxu0 0.0
    %366 = vmatprep.subr.mxu0 0.0
    %367 = vmatpush1.msra.mxu0 0.0
    %368 = vmatprep.subr.mxu0 0.0
    %369 = vmatpush1.msra.mxu0 0.0
    %370 = vmatprep.subr.mxu0 0.0
    %371 = vmatpush1.msra.mxu0 0.0
    %372 = vmatprep.subr.mxu0 0.0
    %373 = vmatpush1.msra.mxu0 0.0
    %374 = vmatprep.subr.mxu0 0.0
    %375 = vmatpush1.msra.mxu0 0.0
    %376 = vmatprep.subr.mxu0 0.0
    %377 = vmatpush1.msra.mxu0 0.0
    %378 = vmatprep.subr.mxu0 0.0
    %379 = vmatpush1.msra.mxu0 0.0
    %380 = vmatprep.subr.mxu0 0.0
    %381 = vmatpush1.msra.mxu0 0.0
    %382 = vmatprep.subr.mxu0 0.0
    %383 = vmatpush1.msra.mxu0 0.0
    %384 = vmatprep.subr.mxu0 0.0
    %385 = vmatpush1.msra.mxu0 0.0
    %386 = vmatprep.subr.mxu0 0.0
    %387 = vmatpush1.msra.mxu0 0.0
    %388 = vmatprep.subr.mxu0 0.0
    %389 = vmatpush1.msra.mxu0 0.0
    %390 = vmatprep.subr.mxu0 0.0
    %391 = vmatpush1.msra.mxu0 0.0
    %392 = vmatprep.subr.mxu0 0.0
    %393 = vmatpush1.msra.mxu0 0.0
    %394 = vmatprep.subr.mxu0 0.0
    %395 = vmatpush1.msra.mxu0 0.0
    %396 = vmatprep.subr.mxu0 0.0
    %397 = vmatpush1.msra.mxu0 0.0
    %398 = vmatprep.subr.mxu0 0.0
    %399 = vmatpush1.msra.mxu0 0.0
    %400 = vmatprep.subr.mxu0 0.0
    %401 = vmatpush1.msra.mxu0 0.0
    %402 = vmatprep.subr.mxu0 0.0
    %403 = vmatpush1.msra.mxu0 0.0
    %404 = vmatprep.subr.mxu0 0.0
    %405 = vmatpush1.msra.mxu0 0.0
    %406 = vmatprep.subr.mxu0 0.0
    %407 = vmatpush1.msra.mxu0 0.0
    %408 = vmatprep.subr.mxu0 0.0
    %409 = vmatpush1.msra.mxu0 0.0
    %410 = vmatprep.subr.mxu0 0.0
    %411 = vmatpush1.msra.mxu0 0.0
    %412 = vmatprep.subr.mxu0 0.0
    %413 = vmatpush1.msra.mxu0 0.0
    %414 = vmatprep.subr.mxu0 0.0
    %415 = vmatpush1.msra.mxu0 0.0
    %416 = vmatprep.mubr.f32.mxu0 0.0
    %417 = vmatmul.mubr.f32.gmra.mrb[0].mxu0 %v49
    %v418 = vpop.f32.mrb[0].mxu0
    %v419 = vadd.f32 0.0, %v418
    %v420 = vpop.f32.mrb[0].mxu0
    %v421 = vadd.f32 0.0, %v420
    %422 = vdwg.mxu0
    %423 = vmatprep.subr.mxu0 %v347
    %424 = vmatpush1.msra.mxu0 %v346
    %425 = vmatprep.subr.mxu0 0.0
    %426 = vmatpush1.msra.mxu0 0.0
    %427 = vmatprep.subr.mxu0 0.0
    %428 = vmatpush1.msra.mxu0 0.0
    %429 = vmatprep.subr.mxu0 0.0
    %430 = vmatpush1.msra.mxu0 0.0
    %431 = vmatprep.subr.mxu0 0.0
    %432 = vmatpush1.msra.mxu0 0.0
    %433 = vmatprep.subr.mxu0 0.0
    %434 = vmatpush1.msra.mxu0 0.0
    %435 = vmatprep.subr.mxu0 0.0
    %436 = vmatpush1.msra.mxu0 0.0
    %437 = vmatprep.subr.mxu0 0.0
    %438 = vmatpush1.msra.mxu0 0.0
    %439 = vmatprep.subr.mxu0 0.0
    %440 = vmatpush1.msra.mxu0 0.0
    %441 = vmatprep.subr.mxu0 0.0
    %442 = vmatpush1.msra.mxu0 0.0
    %443 = vmatprep.subr.mxu0 0.0
    %444 = vmatpush1.msra.mxu0 0.0
    %445 = vmatprep.subr.mxu0 0.0
    %446 = vmatpush1.msra.mxu0 0.0
    %447 = vmatprep.subr.mxu0 0.0
    %448 = vmatpush1.msra.mxu0 0.0
    %449 = vmatprep.subr.mxu0 0.0
    %450 = vmatpush1.msra.mxu0 0.0
    %451 = vmatprep.subr.mxu0 0.0
    %452 = vmatpush1.msra.mxu0 0.0
    %453 = vmatprep.subr.mxu0 0.0
    %454 = vmatpush1.msra.mxu0 0.0
    %455 = vmatprep.subr.mxu0 0.0
    %456 = vmatpush1.msra.mxu0 0.0
    %457 = vmatprep.subr.mxu0 0.0
    %458 = vmatpush1.msra.mxu0 0.0
    %459 = vmatprep.subr.mxu0 0.0
    %460 = vmatpush1.msra.mxu0 0.0
    %461 = vmatprep.subr.mxu0 0.0
    %462 = vmatpush1.msra.mxu0 0.0
    %463 = vmatprep.subr.mxu0 0.0
    %464 = vmatpush1.msra.mxu0 0.0
    %465 = vmatprep.subr.mxu0 0.0
    %466 = vmatpush1.msra.mxu0 0.0
    %467 = vmatprep.subr.mxu0 0.0
    %468 = vmatpush1.msra.mxu0 0.0
    %469 = vmatprep.subr.mxu0 0.0
    %470 = vmatpush1.msra.mxu0 0.0
    %471 = vmatprep.subr.mxu0 0.0
    %472 = vmatpush1.msra.mxu0 0.0
    %473 = vmatprep.subr.mxu0 0.0
    %474 = vmatpush1.msra.mxu0 0.0
    %475 = vmatprep.subr.mxu0 0.0
    %476 = vmatpush1.msra.mxu0 0.0
    %477 = vmatprep.subr.mxu0 0.0
    %478 = vmatpush1.msra.mxu0 0.0
    %479 = vmatprep.subr.mxu0 0.0
    %480 = vmatpush1.msra.mxu0 0.0
    %481 = vmatprep.subr.mxu0 0.0
    %482 = vmatpush1.msra.mxu0 0.0
    %483 = vmatprep.subr.mxu0 0.0
    %484 = vmatpush1.msra.mxu0 0.0
    %485 = vmatprep.subr.mxu0 0.0
    %486 = vmatpush1.msra.mxu0 0.0
    %487 = vmatprep.mubr.f32.mxu0 0.0
    %488 = vmatmul.mubr.f32.gmra.mrb[0].mxu0 %v49
    %v489 = vpop.f32.mrb[0].mxu0
    %v490 = vadd.f32 0.0, %v489
    %v491 = vpop.f32.mrb[0].mxu0
    %v492 = vadd.f32 0.0, %v491
    %493 = vdwg.mxu0
    %494 = vmatprep.subr.mxu0 %v349
    %495 = vmatpush1.msra.mxu0 %v348
    %496 = vmatprep.subr.mxu0 0.0
    %497 = vmatpush1.msra.mxu0 0.0
    %498 = vmatprep.subr.mxu0 0.0
    %499 = vmatpush1.msra.mxu0 0.0
    %500 = vmatprep.subr.mxu0 0.0
    %501 = vmatpush1.msra.mxu0 0.0
    %502 = vmatprep.subr.mxu0 0.0
    %503 = vmatpush1.msra.mxu0 0.0
    %504 = vmatprep.subr.mxu0 0.0
    %505 = vmatpush1.msra.mxu0 0.0
    %506 = vmatprep.subr.mxu0 0.0
    %507 = vmatpush1.msra.mxu0 0.0
    %508 = vmatprep.subr.mxu0 0.0
    %509 = vmatpush1.msra.mxu0 0.0
    %510 = vmatprep.subr.mxu0 0.0
    %511 = vmatpush1.msra.mxu0 0.0
    %512 = vmatprep.subr.mxu0 0.0
    %513 = vmatpush1.msra.mxu0 0.0
    %514 = vmatprep.subr.mxu0 0.0
    %515 = vmatpush1.msra.mxu0 0.0
    %516 = vmatprep.subr.mxu0 0.0
    %517 = vmatpush1.msra.mxu0 0.0
    %518 = vmatprep.subr.mxu0 0.0
    %519 = vmatpush1.msra.mxu0 0.0
    %520 = vmatprep.subr.mxu0 0.0
    %521 = vmatpush1.msra.mxu0 0.0
    %522 = vmatprep.subr.mxu0 0.0
    %523 = vmatpush1.msra.mxu0 0.0
    %524 = vmatprep.subr.mxu0 0.0
    %525 = vmatpush1.msra.mxu0 0.0
    %526 = vmatprep.subr.mxu0 0.0
    %527 = vmatpush1.msra.mxu0 0.0
    %528 = vmatprep.subr.mxu0 0.0
    %529 = vmatpush1.msra.mxu0 0.0
    %530 = vmatprep.subr.mxu0 0.0
    %531 = vmatpush1.msra.mxu0 0.0
    %532 = vmatprep.subr.mxu0 0.0
    %533 = vmatpush1.msra.mxu0 0.0
    %534 = vmatprep.subr.mxu0 0.0
    %535 = vmatpush1.msra.mxu0 0.0
    %536 = vmatprep.subr.mxu0 0.0
    %537 = vmatpush1.msra.mxu0 0.0
    %538 = vmatprep.subr.mxu0 0.0
    %539 = vmatpush1.msra.mxu0 0.0
    %540 = vmatprep.subr.mxu0 0.0
    %541 = vmatpush1.msra.mxu0 0.0
    %542 = vmatprep.subr.mxu0 0.0
    %543 = vmatpush1.msra.mxu0 0.0
    %544 = vmatprep.subr.mxu0 0.0
    %545 = vmatpush1.msra.mxu0 0.0
    %546 = vmatprep.subr.mxu0 0.0
    %547 = vmatpush1.msra.mxu0 0.0
    %548 = vmatprep.subr.mxu0 0.0
    %549 = vmatpush1.msra.mxu0 0.0
    %550 = vmatprep.subr.mxu0 0.0
    %551 = vmatpush1.msra.mxu0 0.0
    %552 = vmatprep.subr.mxu0 0.0
    %553 = vmatpush1.msra.mxu0 0.0
    %554 = vmatprep.subr.mxu0 0.0
    %555 = vmatpush1.msra.mxu0 0.0
    %556 = vmatprep.subr.mxu0 0.0
    %557 = vmatpush1.msra.mxu0 0.0
    %558 = vmatprep.mubr.f32.mxu0 0.0
    %559 = vmatmul.mubr.f32.gmra.mrb[0].mxu0 %v49
    %v560 = vpop.f32.mrb[0].mxu0
    %v561 = vadd.f32 0.0, %v560
    %v562 = vpop.f32.mrb[0].mxu0
    %v563 = vadd.f32 0.0, %v562
    %564 = vdwg.mxu0
    %565 = vmatprep.subr.mxu0 %v351
    %566 = vmatpush1.msra.mxu0 %v350
    %567 = vmatprep.subr.mxu0 0.0
    %568 = vmatpush1.msra.mxu0 0.0
    %569 = vmatprep.subr.mxu0 0.0
    %570 = vmatpush1.msra.mxu0 0.0
    %571 = vmatprep.subr.mxu0 0.0
    %572 = vmatpush1.msra.mxu0 0.0
    %573 = vmatprep.subr.mxu0 0.0
    %574 = vmatpush1.msra.mxu0 0.0
    %575 = vmatprep.subr.mxu0 0.0
    %576 = vmatpush1.msra.mxu0 0.0
    %577 = vmatprep.subr.mxu0 0.0
    %578 = vmatpush1.msra.mxu0 0.0
    %579 = vmatprep.subr.mxu0 0.0
    %580 = vmatpush1.msra.mxu0 0.0
    %581 = vmatprep.subr.mxu0 0.0
    %582 = vmatpush1.msra.mxu0 0.0
    %583 = vmatprep.subr.mxu0 0.0
    %584 = vmatpush1.msra.mxu0 0.0
    %585 = vmatprep.subr.mxu0 0.0
    %586 = vmatpush1.msra.mxu0 0.0
    %587 = vmatprep.subr.mxu0 0.0
    %588 = vmatpush1.msra.mxu0 0.0
    %589 = vmatprep.subr.mxu0 0.0
    %590 = vmatpush1.msra.mxu0 0.0
    %591 = vmatprep.subr.mxu0 0.0
    %592 = vmatpush1.msra.mxu0 0.0
    %593 = vmatprep.subr.mxu0 0.0
    %594 = vmatpush1.msra.mxu0 0.0
    %595 = vmatprep.subr.mxu0 0.0
    %596 = vmatpush1.msra.mxu0 0.0
    %597 = vmatprep.subr.mxu0 0.0
    %598 = vmatpush1.msra.mxu0 0.0
    %599 = vmatprep.subr.mxu0 0.0
    %600 = vmatpush1.msra.mxu0 0.0
    %601 = vmatprep.subr.mxu0 0.0
    %602 = vmatpush1.msra.mxu0 0.0
    %603 = vmatprep.subr.mxu0 0.0
    %604 = vmatpush1.msra.mxu0 0.0
    %605 = vmatprep.subr.mxu0 0.0
    %606 = vmatpush1.msra.mxu0 0.0
    %607 = vmatprep.subr.mxu0 0.0
    %608 = vmatpush1.msra.mxu0 0.0
    %609 = vmatprep.subr.mxu0 0.0
    %610 = vmatpush1.msra.mxu0 0.0
    %611 = vmatprep.subr.mxu0 0.0
    %612 = vmatpush1.msra.mxu0 0.0
    %613 = vmatprep.subr.mxu0 0.0
    %614 = vmatpush1.msra.mxu0 0.0
    %615 = vmatprep.subr.mxu0 0.0
    %616 = vmatpush1.msra.mxu0 0.0
    %617 = vmatprep.subr.mxu0 0.0
    %618 = vmatpush1.msra.mxu0 0.0
    %619 = vmatprep.subr.mxu0 0.0
    %620 = vmatpush1.msra.mxu0 0.0
    %621 = vmatprep.subr.mxu0 0.0
    %622 = vmatpush1.msra.mxu0 0.0
    %623 = vmatprep.subr.mxu0 0.0
    %624 = vmatpush1.msra.mxu0 0.0
    %625 = vmatprep.subr.mxu0 0.0
    %626 = vmatpush1.msra.mxu0 0.0
    %627 = vmatprep.subr.mxu0 0.0
    %628 = vmatpush1.msra.mxu0 0.0
    %629 = vmatprep.mubr.f32.mxu0 0.0
    %630 = vmatmul.mubr.f32.gmra.mrb[0].mxu0 %v49
    %v631 = vpop.f32.mrb[0].mxu0
    %v632 = vadd.f32 0.0, %v631
    %v633 = vpop.f32.mrb[0].mxu0
    %v634 = vadd.f32 0.0, %v633
    %635 = vdwg.mxu0
    %s636 = scalar_lea.vmem [#allocation7], 64
    %637 = vst [vmem:[%s636] sm:$0xff] %v419
    %638 = vst [vmem:[%s636 + $0x8] sm:$0xff] %v421
    %639 = vst [vmem:[%s636 + $0x10] sm:$0xff] %v490
    %640 = vst [vmem:[%s636 + $0x18] sm:$0xff] %v492
    %641 = vst [vmem:[%s636 + $0x20] sm:$0xff] %v561
    %642 = vst [vmem:[%s636 + $0x28] sm:$0xff] %v563
    %643 = vst [vmem:[%s636 + $0x30] sm:$0xff] %v632
    %644 = vst [vmem:[%s636 + $0x38] sm:$0xff] %v634
    // Predicated region
    $region18: #{_bokeh_pallas.1} parent=1 // pred_check
      _
    $region19: #{_bokeh_pallas.1} parent=1 // pred_check_branch
      %646 = sbr.rel (0) target = $region21
    $region20: #{_bokeh_pallas.1} parent=1 // pred_region
      %s648 = ssub.s32 2048, 2048
      %649 = vsyncadd [#allocation4], %s648
      %s650 = sshll.u32 [#allocation7], 4
      %s651 = int_to_ptr.vmem [resolvable:$true] %s650
      %656 = dma.vmem_to_hbm [thread:$0]  %s651, 2048, %s2, [#allocation4], 1024, 1024, 64
    $region21: #{_bokeh_pallas.1} parent=1 // pred_fallthru
      _
    // Predicated region
    $region22: #{_bokeh_pallas.1} parent=1 // pred_check
      _
    $region23: #{_bokeh_pallas.1} parent=1 // pred_check_branch
      %658 = sbr.rel (0) target = $region25
    $region24: #{_bokeh_pallas.1} parent=1 // pred_region
      %659 = dma.done [#allocation4], 2048
    $region25: #{_bokeh_pallas.1} parent=1 // pred_fallthru
      _
    %660 = vsyncpa [#allocation3], 1
    %661 = vsyncpa [#allocation6], 1
    %662 = vsyncpa [#allocation4], 1

</llo_original>
